<compile_context>
chip_gen: v7x
topology: tpu7x:2x2x1
jax: 0.10.0
libtpu: 0.0.40
codegen_flags: <defaults>
</compile_context>

<pallas_src>
import functools

import jax
import jax.numpy as jnp
from jax.experimental import pallas as pl
from jax.experimental.pallas import tpu as pltpu


def _channel_pad_kernel(x_ref, o_ref, *, c_in, value):
    # x_ref: (1, C, TW), o_ref: (1, C_out, TW). Copy the real channels, fill the rest.
    o_ref[:, :c_in, :] = x_ref[...]
    pad = o_ref.shape[1] - c_in
    o_ref[:, c_in:, :] = jnp.full((o_ref.shape[0], pad, o_ref.shape[2]),
                                  value, o_ref.dtype)


def _pick_tw(hw, c_in, c_out, itemsize, budget_bytes=8 * 1024 * 1024):
    """Pick a lane-dense spatial tile width TW that divides HW and keeps
    double-buffered (input + output) blocks within a conservative VMEM budget."""
    if hw % 128 != 0:
        # Full extent satisfies the (8,128) tiling rule ("equals full array dim").
        return hw
    per_col_bytes = (c_in + c_out) * itemsize * 2  # in+out, double-buffered
    tw = (budget_bytes // max(per_col_bytes, 1)) // 128 * 128
    tw = max(128, min(tw, hw))
    while hw % tw != 0:   # keep the grid exact (no ragged edge blocks)
        tw -= 128
    return tw


def rev_channel_pad_2d(x, pad_size: int, mode: str = "constant", value=0):
    """Pallas implementation of RevChannelPad2D.forward for NCHW inputs.

    `value` must be a static Python scalar (matches the nn.Module, which stores
    it at construction time).
    """
    assert pad_size >= 0
    # TODO(synk): only 'constant' mode is implemented (PyTorch's F.pad cannot
    # reflect/replicate over the channel dim of a 4D tensor anyway).
    assert mode == "constant"

    if pad_size == 0:
        return x

    N, C, H, W = x.shape
    C_out = C + pad_size
    HW = H * W

    # TODO(synk): for very large C with tiny H*W the full-channel block could
    # exceed VMEM; a channel-tiled variant would be needed for that regime.
    xf = x.reshape(N, C, HW)                      # free reshape (contiguous)
    itemsize = jnp.dtype(x.dtype).itemsize
    TW = _pick_tw(HW, C, C_out, itemsize)
    grid = (N, HW // TW)

    kernel = functools.partial(_channel_pad_kernel, c_in=C, value=value)

    yf = pl.pallas_call(
        kernel,
        out_shape=jax.ShapeDtypeStruct((N, C_out, HW), x.dtype),
        grid=grid,
        in_specs=[pl.BlockSpec((1, C, TW), lambda n, w: (n, 0, w))],
        out_specs=pl.BlockSpec((1, C_out, TW), lambda n, w: (n, 0, w)),
        compiler_params=pltpu.CompilerParams(
            dimension_semantics=("parallel", "parallel")
        ),
    )(xf)

    return yf.reshape(N, C_out, H, W)


def invert(y, pad_size: int):
    """Inverse op (plain JAX glue, matches RevChannelPad2D.invert)."""
    return y[:, : y.shape[1] - pad_size, :, :]


if __name__ == "__main__":
    key = jax.random.PRNGKey(0)
    N, C, H, W = 2, 4, 16, 16
    pad_size = 3
    value = 0.5

    x = jax.random.normal(key, (N, C, H, W), dtype=jnp.float32)

    y = rev_channel_pad_2d(x, pad_size, mode="constant", value=value)
    y = jax.block_until_ready(y)

    # Reference check against plain JAX padding.
    y_ref = jnp.pad(
        x, ((0, 0), (0, pad_size), (0, 0), (0, 0)), mode="constant",
        constant_values=value,
    )
    assert y.shape == (N, C + pad_size, H, W), y.shape
    assert jnp.allclose(y, y_ref), "mismatch vs reference pad"

    # pad_size == 0 path is identity.
    y0 = rev_channel_pad_2d(x, 0, mode="constant", value=value)
    assert jnp.allclose(y0, x)

    # Round-trip through invert recovers the input.
    x_rec = invert(y, pad_size)
    assert jnp.allclose(x_rec, x), "invert did not recover input"

    print("KERNEL_OK")
</pallas_src>

<mosaic_0001>
module attributes {stable_mosaic.version = 11 : i64} {
  func.func @_channel_pad_kernel(%arg0: i32, %arg1: i32, %arg2: memref<1x4x256xf32, #tpu.memory_space<vmem>>, %arg3: memref<1x7x256xf32, #tpu.memory_space<vmem>>) attributes {dimension_semantics = [#tpu.dimension_semantics<parallel>, #tpu.dimension_semantics<parallel>], iteration_bounds = array<i64: 2, 1>, scalar_prefetch = 0 : i64, scratch_operands = 0 : i64, tpu.core_type = #tpu.core_type<tc>, window_params = [{transform_indices = @transform_0, window_bounds = array<i64: 1, 4, 256>}, {transform_indices = @transform_1, window_bounds = array<i64: 1, 7, 256>}]} {
    %c0 = arith.constant 0 : index
    %c0_0 = arith.constant 0 : index
    %c0_1 = arith.constant 0 : index
    %0 = vector.load %arg2[%c0, %c0_0, %c0_1] : memref<1x4x256xf32, #tpu.memory_space<vmem>>, vector<1x4x256xf32>
    %c0_2 = arith.constant 0 : index
    %c0_3 = arith.constant 0 : index
    %c0_4 = arith.constant 0 : index
    %1 = vector.load %arg3[%c0_2, %c0_3, %c0_4] : memref<1x7x256xf32, #tpu.memory_space<vmem>>, vector<1x4x256xf32>
    tpu.vector_store %arg3[%c0_2, %c0_3, %c0_4], %0 {strides = array<i32>} : memref<1x7x256xf32, #tpu.memory_space<vmem>>, vector<1x4x256xf32>,
    %cst = arith.constant 5.000000e-01 : f32
    %2 = vector.broadcast %cst : f32 to vector<1x3x256xf32>
    %c0_5 = arith.constant 0 : index
    %c4 = arith.constant 4 : index
    %c0_6 = arith.constant 0 : index
    %3 = vector.load %arg3[%c0_5, %c4, %c0_6] : memref<1x7x256xf32, #tpu.memory_space<vmem>>, vector<1x3x256xf32>
    tpu.vector_store %arg3[%c0_5, %c4, %c0_6], %2 {strides = array<i32>} : memref<1x7x256xf32, #tpu.memory_space<vmem>>, vector<1x3x256xf32>,
    return
  }
  func.func @transform_0(%arg0: i32, %arg1: i32) -> (i32, i32, i32) {
    %c0_i32 = arith.constant 0 : i32
    %c0_i32_0 = arith.constant 0 : i32
    return %arg0, %c0_i32, %arg1 : i32, i32, i32
  }
  func.func @transform_1(%arg0: i32, %arg1: i32) -> (i32, i32, i32) {
    %c0_i32 = arith.constant 0 : i32
    %c0_i32_0 = arith.constant 0 : i32
    return %arg0, %c0_i32, %arg1 : i32, i32, i32
  }
}

</mosaic_0001>

<llo_original>
// kernel: tpu_custom_call.1
$region0: #{tpu_custom_call.1}
  #allocation0 [shape = 'u32[]', space=smem, size = 0x4, offset = 0x4, fixed_abs, tag = 'smem constant byte address 0x4 - core index']
  #allocation1 [shape = 'u32[144,128]{1,0:T(1,128)}', space=vmem, size = 0x12000, scoped, tag = 'internal scratch']
  %s0 = inlined_call_operand.hbm [shape: f32[2,4,256], index: 0, kind: input, shape index: {}]
  %s1 = inlined_call_operand.vmem [shape: f32[2,7,256], index: 1, kind: output, shape index: {}]
  %s2 = sld [smem:[#allocation0]]
  $region41: #{tpu_custom_call.1} parent=0
    _
  %s4 = ssub.s32 1, %s2
  %s5 = scalar_select 0, %s4, %s2
  $region1: #{tpu_custom_call.1} parent=0
    #allocation2 [shape = 'u8[8192]{0}', space=vmem, size = 0x2000, scoped, tag = 'input window, operand 0']
    #allocation3 [shape = 's32[2]{0}', space=sflag, size = 0x8, scoped, tag = 'scoped memory for tpu_custom_call.1']
    %6 = vsyncpa [#allocation3], 0
    %s7 = scalar_lea.sflag [#allocation3], 1
    %8 = vsyncpa %s7, 0
    loop: start=0, step=1, limit=4
    $region2: #{tpu_custom_call.1} parent=1 // loop_pre_header
      _
    $region3: #{tpu_custom_call.1} parent=1 // loop_header
      %s10 = sphi 0, %s14
      %p11 = scmp.ge.s32.totalorder %s10, 4
      %s17 = sphi 0, %s29
      %s18 = sphi 0, %s25
      %s19 = sphi 0, %s17
      %s20 = sphi 0, %s18
      %s21 = sphi 0, %s19
      %s22 = sphi 0, %s20
      %s34 = sphi 0, %s36
      %s37 = sphi 0, %s34
      %s38 = sphi 0, %s37
      %s54 = sphi 0, %s38
      %s62 = sphi 0, %s64
      %s65 = sphi 0, %s62
      %s66 = sphi 0, %s65
      %s82 = sphi 0, %s66
    $region4: #{tpu_custom_call.1} parent=1 // loop_header_branch
      %13 = sbr.rel (%p11) target = $region8
    $region5: #{tpu_custom_call.1} parent=1 // loop_body
      %s15 = ssub.s32 %s10, 1
      %s16 = ssub.s32 %s10, 2
      %s23 = sadd.s32 1, %s18
      %p24 = scmp.ge.s32.totalorder %s23, 1
      %s25 = scalar_select %p24, 0, %s23
      %s26 = sadd.s32 1, %s17
      %s27 = scalar_select %p24, %s26, %s17
      %p28 = scmp.ge.s32.totalorder %s27, 2
      %s29 = scalar_select %p28, 0, %s27
      %s30 = ssub.s32 %s17, %s29
      %s31 = ssub.s32 %s18, %s25
      %s32 = sor.u32 %s30, %s31
      %p33 = scmp.eq.s32.totalorder %s32, 0
      %s35 = sadd.s32 %s34, 1
      %s36 = scalar_select %p33, %s34, %s35
      %p39 = pneg %p33
      %p40 = scmp.eq.s32.totalorder %s10, 1
      %p41 = por %p39, %p40
      %p42 = scmp.ne.s32.totalorder %s34, %s37
      %p43 = scmp.eq.s32.totalorder %s10, 0
      %p44 = por %p42, %p43
      %p45 = scmp.ne.s32.totalorder %s34, %s37
      %p46 = scmp.eq.s32.totalorder %s15, 1
      %p47 = por %p45, %p46
      %p48 = scmp.ne.s32.totalorder %s37, %s38
      %p49 = scmp.eq.s32.totalorder %s15, 0
      %p50 = por %p48, %p49
      %p51 = scmp.ne.s32.totalorder %s37, %s38
      %p52 = scmp.eq.s32.totalorder %s16, 1
      %p53 = por %p51, %p52
      %p55 = scmp.ne.s32.totalorder %s38, %s54
      %p56 = scmp.eq.s32.totalorder %s16, 0
      %p57 = por %p55, %p56
      %s58 = ssub.s32 %s17, %s29
      %s59 = ssub.s32 %s18, %s25
      %s60 = sor.u32 %s58, %s59
      %p61 = scmp.eq.s32.totalorder %s60, 0
      %s63 = sadd.s32 %s62, 1
      %s64 = scalar_select %p61, %s62, %s63
      %p67 = pneg %p61
      %p68 = scmp.eq.s32.totalorder %s10, 1
      %p69 = por %p67, %p68
      %p70 = scmp.ne.s32.totalorder %s62, %s65
      %p71 = scmp.eq.s32.totalorder %s10, 0
      %p72 = por %p70, %p71
      %p73 = scmp.ne.s32.totalorder %s62, %s65
      %p74 = scmp.eq.s32.totalorder %s15, 1
      %p75 = por %p73, %p74
      %p76 = scmp.ne.s32.totalorder %s65, %s66
      %p77 = scmp.eq.s32.totalorder %s15, 0
      %p78 = por %p76, %p77
      %p79 = scmp.ne.s32.totalorder %s65, %s66
      %p80 = scmp.eq.s32.totalorder %s16, 1
      %p81 = por %p79, %p80
      %p83 = scmp.ne.s32.totalorder %s66, %s82
      %p84 = scmp.eq.s32.totalorder %s16, 0
      %p85 = por %p83, %p84
      %p86 = scmp.le.s32.totalorder 1, %s10
      %p87 = scmp.lt.s32.totalorder %s10, 3
      %p88 = pnand %p86, %p87
      %p89 = pneg %p88
      // Predicated region
      $region9: #{tpu_custom_call.1} parent=5 // pred_check
        _
      $region10: #{tpu_custom_call.1} parent=5 // pred_check_branch
        %91 = sbr.rel (%p88) target = $region12
      $region11: #{tpu_custom_call.1} parent=5 // pred_region
        %s92 = ssub.s32 %s10, 1
      $region12: #{tpu_custom_call.1} parent=5 // pred_fallthru
        _
      %p93 = scmp.lt.s32.totalorder %s10, 2
      // Predicated region
      $region13: #{tpu_custom_call.1} parent=5 // pred_check
        %p94 = pneg %p93
      $region14: #{tpu_custom_call.1} parent=5 // pred_check_branch
        %96 = sbr.rel (%p94) target = $region16
      $region15: #{tpu_custom_call.1} parent=5 // pred_region
        // Predicated region
        $region17: #{tpu_custom_call.1} parent=15 // pred_check
          %p97 = pneg %p44
        $region18: #{tpu_custom_call.1} parent=15 // pred_check_branch
          %99 = sbr.rel (%p97) target = $region20
        $region19: #{tpu_custom_call.1} parent=15 // pred_region
          %s100 = sand.u32 %s34, 1
          %s101 = scalar_lea.sflag [#allocation3], %s100
          %s102 = sand.u32 %s34, 1
          %s103 = smul.addr %s102, 8
          %s104 = scalar_lea.vmem [#allocation2], %s103
          %s105 = smul.u32 2, %s18
          %s107 = ssub.s32 128, 128
          %108 = vsyncadd %s101, %s107
          %s109 = smul.addr %s17, 2
          %s110 = sadd.s32 %s105, %s109
          %s111 = smul.addr %s110, 64
          %s112 = scalar_lea.hbm %s0, %s111
          %s114 = sshll.u32 %s104, 4
          %s115 = int_to_ptr.vmem [resolvable:$true] %s114
          %117 = dma.hbm_to_vmem [thread:$0]  %s112, 128, %s115, %s101
        $region20: #{tpu_custom_call.1} parent=15 // pred_fallthru
          _
      $region16: #{tpu_custom_call.1} parent=5 // pred_fallthru
        _
      %p118 = scmp.le.s32.totalorder 1, %s10
      %p119 = scmp.lt.s32.totalorder %s10, 3
      %p120 = pnand %p118, %p119
      %p121 = pneg %p120
      // Predicated region
      $region21: #{tpu_custom_call.1} parent=5 // pred_check
        _
      $region22: #{tpu_custom_call.1} parent=5 // pred_check_branch
        %123 = sbr.rel (%p120) target = $region24
      $region23: #{tpu_custom_call.1} parent=5 // pred_region
        %s124 = ssub.s32 %s10, 1
        %s125 = sand.u32 %s37, 1
        %s126 = scalar_lea.sflag [#allocation3], %s125
        %s127 = sand.u32 %s37, 1
        %s128 = smul.addr %s127, 8
        %s129 = scalar_lea.vmem [#allocation2], %s128
        // Predicated region
        $region25: #{tpu_custom_call.1} parent=23 // pred_check
          %p130 = pneg %p50
        $region26: #{tpu_custom_call.1} parent=23 // pred_check_branch
          %132 = sbr.rel (%p130) target = $region28
        $region27: #{tpu_custom_call.1} parent=23 // pred_region
          %133 = dma.done %s126, 128
        $region28: #{tpu_custom_call.1} parent=23 // pred_fallthru
          _
        %s134 = sand.u32 %s37, 1
        %s135 = scalar_lea.sflag [#allocation3], %s134
        %s136 = sand.u32 %s37, 1
        %s137 = smul.addr %s136, 8
        %s138 = scalar_lea.vmem [#allocation2], %s137
        %p139 = pneg %p50
        %p140 = pneg %p47
        %p141 = pneg %p78
        %p142 = pneg %p75
        %s143 = smul.u32 2, %s20
        %p144 = scmp.lt.s32.totalorder %s19, 1
        %s145 = scalar_select %p144, %s19, 1
        %p146 = scmp.lt.s32.totalorder %s143, 1
        %s147 = scalar_select %p146, %s143, 1
        %s148 = smul.addr %s145, 2
        %s149 = sadd.s32 %s147, %s148
        %s150 = smul.addr %s149, 8
        %s151 = scalar_lea.vmem %s1, %s150
        %s152 = smul.u32 2, %s20
        %s153 = smul.u32 2, %s20
        %p154 = scmp.lt.s32.totalorder %s19, 1
        %s155 = scalar_select %p154, %s19, 1
        %p156 = scmp.lt.s32.totalorder %s153, 1
        %s157 = scalar_select %p156, %s153, 1
        %s158 = smul.addr %s155, 2
        %s159 = sadd.s32 %s157, %s158
        %s160 = smul.addr %s159, 8
        %s161 = scalar_lea.vmem %s1, %s160
        %s162 = smul.u32 2, %s20
        %v163 = vld [vmem:[%s129] sm:$0xff]
        %v165 = vcombine.high %v163, %v163
        %167 = vst [vmem:[%s161] sm:$0xf] %v163
        %168 = vst [vmem:[%s161 + $0x8] sm:$0xf] %v165
        %169 = vst [vmem:[%s161] sm:$0x70] 0.5
        %170 = vst [vmem:[%s161 + $0x8] sm:$0x70] 0.5
        %s171 = smul.u32 2, %s20
        %p172 = scmp.lt.s32.totalorder %s19, 1
        %s173 = scalar_select %p172, %s19, 1
        %p174 = scmp.lt.s32.totalorder %s171, 1
        %s175 = scalar_select %p174, %s171, 1
        %s176 = smul.addr %s173, 2
        %s177 = sadd.s32 %s175, %s176
        %s178 = smul.addr %s177, 8
        %s179 = scalar_lea.vmem %s1, %s178
        // Predicated region
        $region29: #{tpu_custom_call.1} parent=23 // pred_check
          %p180 = pneg %p75
        $region30: #{tpu_custom_call.1} parent=23 // pred_check_branch
          %182 = sbr.rel (%p180) target = $region32
        $region31: #{tpu_custom_call.1} parent=23 // pred_region
          %s183 = smul.u32 2, %s20
        $region32: #{tpu_custom_call.1} parent=23 // pred_fallthru
          _
      $region24: #{tpu_custom_call.1} parent=5 // pred_fallthru
        _
      %p184 = scmp.le.s32.totalorder 2, %s10
      // Predicated region
      $region33: #{tpu_custom_call.1} parent=5 // pred_check
        %p185 = pneg %p184
      $region34: #{tpu_custom_call.1} parent=5 // pred_check_branch
        %187 = sbr.rel (%p185) target = $region36
      $region35: #{tpu_custom_call.1} parent=5 // pred_region
        %s188 = ssub.s32 %s10, 2
        // Predicated region
        $region37: #{tpu_custom_call.1} parent=35 // pred_check
          %p189 = pneg %p81
        $region38: #{tpu_custom_call.1} parent=35 // pred_check_branch
          %191 = sbr.rel (%p189) target = $region40
        $region39: #{tpu_custom_call.1} parent=35 // pred_region
          %s192 = smul.u32 2, %s22
          %p193 = scmp.lt.s32.totalorder %s21, 1
          %s194 = scalar_select %p193, %s21, 1
          %p195 = scmp.lt.s32.totalorder %s192, 1
          %s196 = scalar_select %p195, %s192, 1
          %s197 = smul.addr %s194, 2
          %s198 = sadd.s32 %s196, %s197
          %s199 = smul.addr %s198, 8
          %s200 = scalar_lea.vmem %s1, %s199
        $region40: #{tpu_custom_call.1} parent=35 // pred_fallthru
          _
      $region36: #{tpu_custom_call.1} parent=5 // pred_fallthru
        _
    $region6: #{tpu_custom_call.1} parent=1 // loop_footer
      %s14 = sadd.s32 1, %s10
    $region7: #{tpu_custom_call.1} parent=1 // loop_footer_branch
      %9 = sbr.rel target = $region3
    $region8: #{tpu_custom_call.1} parent=1 // loop_exit
      _
    %201 = vsyncpa [#allocation3], 1
    %s202 = scalar_lea.sflag [#allocation3], 1
    %203 = vsyncpa %s202, 1

</llo_original>
